<compile_context>
chip_gen: v7x
topology: tpu7x:2x2x1
jax: 0.10.0
libtpu: 0.0.40
codegen_flags: <defaults>
</compile_context>

<pallas_src>
import functools

import jax
import jax.numpy as jnp
from jax.experimental import pallas as pl
from jax.experimental.pallas import tpu as pltpu


# ----------------------------------------------------------------------------
# Pallas kernel: unpack int4 planes -> bf16 matmul -> f32 scale/zero hoist.
# Grid: (M tiles, N tiles, K steps); output block resident across the K axis.
# ----------------------------------------------------------------------------
def awq_gemm_kernel(x_ref, qw_ref, scales_ref, zs_ref, o_ref, *,
                    groups_per_block, group_size):
    k = pl.program_id(2)

    @pl.when(k == 0)
    def _():
        o_ref[...] = jnp.zeros_like(o_ref)

    sub = group_size // 8                       # packed rows per group
    x = x_ref[...]                              # (tm, tk)  bf16
    s_all = scales_ref[...]                     # (1, GPB, tn) f32
    zs_all = zs_ref[...]                        # (1, GPB, tn) f32 (= zeros*scales)

    acc = jnp.zeros(o_ref.shape, jnp.float32)
    for gl in range(groups_per_block):          # small, statically unrolled
        # --- unpack one group's packed int4 weights: (sub, tn) -> (G, tn) ----
        packed = qw_ref[pl.ds(gl * sub, sub), :]            # (sub, tn) int32
        planes = [((packed >> (4 * j)) & 0xF).astype(jnp.bfloat16)
                  for j in range(8)]
        q_g = jnp.concatenate(planes, axis=0)               # (G, tn) bf16

        # --- bf16 MXU matmul on raw quantized values ------------------------
        x_g = x[:, gl * group_size:(gl + 1) * group_size]   # (tm, G) bf16
        p = jnp.dot(x_g, q_g, preferred_element_type=jnp.float32)   # (tm, tn)

        # --- apply scale / zero-point on the small accumulator tile ---------
        xsum = jnp.sum(x_g.astype(jnp.float32), axis=1, keepdims=True)  # (tm,1)
        s_g = s_all[:, gl, :]                               # (1, tn) f32
        zs_g = zs_all[:, gl, :]                             # (1, tn) f32
        acc = acc + p * s_g - xsum * zs_g

    o_ref[...] += acc


def awq_linear(x, qw_packed, scales, zeros, *, group_size=128,
               tn=128, groups_per_block=None, tm=None):
    """y = x @ ((qweight - zeros) * scales) with per-group scales/zeros.

    x:          (M, K) float
    qw_packed:  (K // 8, N) int32 -- 8 int4 nibbles per word, plane layout
                within each quantization group (see pack_int4_planes).
    scales:     (K // group_size, N) f32
    zeros:      (K // group_size, N) f32
    """
    M, K = x.shape
    Kp8, N = qw_packed.shape
    assert Kp8 * 8 == K and K % group_size == 0 and group_size % 8 == 0
    n_groups = K // group_size
    assert scales.shape == (n_groups, N) and zeros.shape == (n_groups, N)
    assert N % tn == 0 and tn % 128 == 0

    # --- K tiling: several quantization groups per grid step -----------------
    if groups_per_block is None:
        groups_per_block = min(8, n_groups)
    while n_groups % groups_per_block:
        groups_per_block -= 1
    tk = groups_per_block * group_size
    num_k_steps = n_groups // groups_per_block

    # --- M tiling / padding (handles small-M decode and big-M prefill) -------
    if tm is None:
        tm = 128 if M >= 128 else max(8, ((M + 7) // 8) * 8)
    Mp = ((M + tm - 1) // tm) * tm
    x_pad = x if Mp == M else jnp.pad(x, ((0, Mp - M), (0, 0)))
    x_bf16 = x_pad.astype(jnp.bfloat16)

    # Per-step scale / (zero*scale) rows, shaped so each K step only pulls its
    # own groups into VMEM (no full tables resident, no dynamic sublane index).
    scales3 = scales.reshape(num_k_steps, groups_per_block, N).astype(jnp.float32)
    zs3 = (zeros * scales).reshape(num_k_steps, groups_per_block, N).astype(jnp.float32)

    kernel = functools.partial(awq_gemm_kernel,
                               groups_per_block=groups_per_block,
                               group_size=group_size)

    out = pl.pallas_call(
        kernel,
        out_shape=jax.ShapeDtypeStruct((Mp, N), jnp.float32),
        grid_spec=pltpu.PrefetchScalarGridSpec(
            num_scalar_prefetch=0,
            grid=(Mp // tm, N // tn, num_k_steps),
            in_specs=[
                pl.BlockSpec((tm, tk), lambda i, j, k: (i, k)),            # x
                pl.BlockSpec((tk // 8, tn), lambda i, j, k: (k, j)),       # packed w
                pl.BlockSpec((1, groups_per_block, tn),
                             lambda i, j, k: (k, 0, j)),                   # scales
                pl.BlockSpec((1, groups_per_block, tn),
                             lambda i, j, k: (k, 0, j)),                   # zeros*scales
            ],
            out_specs=pl.BlockSpec((tm, tn), lambda i, j, k: (i, j)),
        ),
        compiler_params=pltpu.CompilerParams(
            dimension_semantics=("parallel", "parallel", "arbitrary")),
    )(x_bf16, qw_packed, scales3, zs3)

    return out[:M]


# ----------------------------------------------------------------------------
# Glue (plain JAX): pseudo_quantize_tensor semantics (zero-point, w_bit=4,
# q_group_size grouping along K) + int4 nibble packing for the kernel.
# ----------------------------------------------------------------------------
def pseudo_quantize_weight(w_fp, w_bit, group_size):
    """w_fp: (N_out, K_in) like nn.Linear.weight.  Returns qweight (K, N) int32
    in [0, 2^w_bit - 1], scales (K//G, N) f32, zeros (K//G, N) f32
    (WQLinear_GEMM layout)."""
    n_out, k_in = w_fp.shape
    max_int = 2 ** w_bit - 1
    wg = w_fp.reshape(n_out, k_in // group_size, group_size)
    w_max = jnp.max(wg, axis=-1)
    w_min = jnp.min(wg, axis=-1)
    scales = jnp.clip((w_max - w_min) / max_int, 1e-5, None)      # (N, K//G)
    zeros = jnp.clip(jnp.round(-w_min / scales), 0, max_int)      # (N, K//G)
    q = jnp.clip(jnp.round(wg / scales[..., None]) + zeros[..., None], 0, max_int)
    q = q.astype(jnp.int32)                                       # (N, K//G, G)
    qweight = jnp.transpose(q.reshape(n_out, k_in), (1, 0))       # (K, N)
    scales_t = jnp.transpose(scales, (1, 0)).astype(jnp.float32)  # (K//G, N)
    zeros_t = jnp.transpose(zeros, (1, 0)).astype(jnp.float32)    # (K//G, N)
    return qweight, scales_t, zeros_t


def pack_int4_planes(qweight, group_size):
    """Pack (K, N) int4 values (stored as int32 in [0,15]) into (K//8, N) int32.

    Plane layout per group: packed[g*(G//8) + r, n] holds, in nibble j, the
    value qweight[g*G + j*(G//8) + r, n].  The in-kernel unpack (shift/mask
    plane j, then concatenate planes along the sublane axis) reproduces the
    natural K order within each group, so no activation permutation is needed.
    """
    K, N = qweight.shape
    G = group_size
    sub = G // 8
    n_groups = K // G
    q4 = qweight.reshape(n_groups, 8, sub, N).astype(jnp.uint32)   # [g, j, r, n]
    shifts = (jnp.arange(8, dtype=jnp.uint32) * 4).reshape(1, 8, 1, 1)
    packed_u32 = jnp.sum(q4 << shifts, axis=1, dtype=jnp.uint32)   # disjoint nibbles
    packed_u32 = packed_u32.reshape(K // 8, N)
    return jax.lax.bitcast_convert_type(packed_u32, jnp.int32)


if __name__ == "__main__":
    key = jax.random.PRNGKey(0)
    k_x, k_w = jax.random.split(key)

    # Small shapes: batch=2, seq=8 -> M=16 tokens; hidden K=512; out N=256.
    M, K, N = 16, 512, 256
    W_BIT, GROUP_SIZE = 4, 128        # quant_config defaults: w_bit=4, q_group_size=128

    x = jax.random.normal(k_x, (M, K), dtype=jnp.float32)
    w_fp = jax.random.normal(k_w, (N, K), dtype=jnp.float32) * 0.05  # nn.Linear.weight

    qweight, scales, zeros = pseudo_quantize_weight(w_fp, W_BIT, GROUP_SIZE)
    qw_packed = pack_int4_planes(qweight, GROUP_SIZE)

    # Pallas AWQ forward (groups_per_block=2 -> two K steps at this toy size;
    # real layer shapes default to up to 8 groups / 1024-wide K steps).
    y = awq_linear(x, qw_packed, scales, zeros,
                   group_size=GROUP_SIZE, tn=128, groups_per_block=2)
    y = jax.block_until_ready(y)

    # Pure-JAX f32 reference: dequantize then matmul.
    s_full = jnp.repeat(scales, GROUP_SIZE, axis=0)   # (K, N)
    z_full = jnp.repeat(zeros, GROUP_SIZE, axis=0)    # (K, N)
    w_deq = (qweight.astype(jnp.float32) - z_full) * s_full
    y_ref = x @ w_deq

    assert y.shape == (M, N)
    max_err = float(jnp.max(jnp.abs(y - y_ref)))
    # bf16 activation path vs f32 reference -> bf16-level tolerance is expected.
    assert jnp.allclose(y, y_ref, atol=5e-2, rtol=5e-2), (
        f"mismatch vs reference (max abs err = {max_err})")
    print("KERNEL_OK")
</pallas_src>

<mosaic_0001>
module attributes {stable_mosaic.version = 11 : i64} {
  func.func @awq_gemm_kernel(%arg0: i32, %arg1: i32, %arg2: i32, %arg3: memref<16x256xbf16, #tpu.memory_space<vmem>>, %arg4: memref<32x128xi32, #tpu.memory_space<vmem>>, %arg5: memref<1x2x128xf32, #tpu.memory_space<vmem>>, %arg6: memref<1x2x128xf32, #tpu.memory_space<vmem>>, %arg7: memref<16x128xf32, #tpu.memory_space<vmem>>) attributes {dimension_semantics = [#tpu.dimension_semantics<parallel>, #tpu.dimension_semantics<parallel>, #tpu.dimension_semantics<arbitrary>], iteration_bounds = array<i64: 1, 2, 2>, scalar_prefetch = 0 : i64, scratch_operands = 0 : i64, tpu.core_type = #tpu.core_type<tc>, window_params = [{transform_indices = @transform_0, window_bounds = array<i64: 16, 256>}, {transform_indices = @transform_1, window_bounds = array<i64: 32, 128>}, {transform_indices = @transform_2, window_bounds = array<i64: 1, 2, 128>}, {transform_indices = @transform_3, window_bounds = array<i64: 1, 2, 128>}, {transform_indices = @transform_4, window_bounds = array<i64: 16, 128>}]} {
    %c0_i32 = arith.constant 0 : i32
    %0 = arith.cmpi eq, %arg2, %c0_i32 : i32
    %1 = arith.extui %0 : i1 to i32
    %c0_i32_0 = arith.constant 0 : i32
    %2 = arith.cmpi ne, %1, %c0_i32_0 : i32
    scf.if %2 {
      %cst_43 = arith.constant 0.000000e+00 : f32
      %126 = vector.broadcast %cst_43 : f32 to vector<16x128xf32>
      %c0_44 = arith.constant 0 : index
      %c0_45 = arith.constant 0 : index
      %127 = vector.load %arg7[%c0_44, %c0_45] : memref<16x128xf32, #tpu.memory_space<vmem>>, vector<16x128xf32>
      tpu.vector_store %arg7[%c0_44, %c0_45], %126 {strides = array<i32>} : memref<16x128xf32, #tpu.memory_space<vmem>>, vector<16x128xf32>,
    } else {
    }
    %c0 = arith.constant 0 : index
    %c0_1 = arith.constant 0 : index
    %3 = vector.load %arg3[%c0, %c0_1] : memref<16x256xbf16, #tpu.memory_space<vmem>>, vector<16x256xbf16>
    %c0_2 = arith.constant 0 : index
    %c0_3 = arith.constant 0 : index
    %c0_4 = arith.constant 0 : index
    %4 = vector.load %arg5[%c0_2, %c0_3, %c0_4] : memref<1x2x128xf32, #tpu.memory_space<vmem>>, vector<1x2x128xf32>
    %c0_5 = arith.constant 0 : index
    %c0_6 = arith.constant 0 : index
    %c0_7 = arith.constant 0 : index
    %5 = vector.load %arg6[%c0_5, %c0_6, %c0_7] : memref<1x2x128xf32, #tpu.memory_space<vmem>>, vector<1x2x128xf32>
    %cst = arith.constant 0.000000e+00 : f32
    %6 = vector.broadcast %cst : f32 to vector<16x128xf32>
    %c0_8 = arith.constant 0 : index
    %c0_9 = arith.constant 0 : index
    %7 = vector.load %arg4[%c0_8, %c0_9] : memref<32x128xi32, #tpu.memory_space<vmem>>, vector<16x128xi32>
    %c0_i32_10 = arith.constant 0 : i32
    %8 = vector.broadcast %c0_i32_10 : i32 to vector<16x128xi32>
    %9 = arith.shrsi %7, %8 : vector<16x128xi32>
    %c15_i32 = arith.constant 15 : i32
    %10 = vector.broadcast %c15_i32 : i32 to vector<16x128xi32>
    %11 = arith.andi %9, %10 : vector<16x128xi32>
    %12 = arith.sitofp %11 : vector<16x128xi32> to vector<16x128xbf16>
    %c4_i32 = arith.constant 4 : i32
    %13 = vector.broadcast %c4_i32 : i32 to vector<16x128xi32>
    %14 = arith.shrsi %7, %13 : vector<16x128xi32>
    %c15_i32_11 = arith.constant 15 : i32
    %15 = vector.broadcast %c15_i32_11 : i32 to vector<16x128xi32>
    %16 = arith.andi %14, %15 : vector<16x128xi32>
    %17 = arith.sitofp %16 : vector<16x128xi32> to vector<16x128xbf16>
    %c8_i32 = arith.constant 8 : i32
    %18 = vector.broadcast %c8_i32 : i32 to vector<16x128xi32>
    %19 = arith.shrsi %7, %18 : vector<16x128xi32>
    %c15_i32_12 = arith.constant 15 : i32
    %20 = vector.broadcast %c15_i32_12 : i32 to vector<16x128xi32>
    %21 = arith.andi %19, %20 : vector<16x128xi32>
    %22 = arith.sitofp %21 : vector<16x128xi32> to vector<16x128xbf16>
    %c12_i32 = arith.constant 12 : i32
    %23 = vector.broadcast %c12_i32 : i32 to vector<16x128xi32>
    %24 = arith.shrsi %7, %23 : vector<16x128xi32>
    %c15_i32_13 = arith.constant 15 : i32
    %25 = vector.broadcast %c15_i32_13 : i32 to vector<16x128xi32>
    %26 = arith.andi %24, %25 : vector<16x128xi32>
    %27 = arith.sitofp %26 : vector<16x128xi32> to vector<16x128xbf16>
    %c16_i32 = arith.constant 16 : i32
    %28 = vector.broadcast %c16_i32 : i32 to vector<16x128xi32>
    %29 = arith.shrsi %7, %28 : vector<16x128xi32>
    %c15_i32_14 = arith.constant 15 : i32
    %30 = vector.broadcast %c15_i32_14 : i32 to vector<16x128xi32>
    %31 = arith.andi %29, %30 : vector<16x128xi32>
    %32 = arith.sitofp %31 : vector<16x128xi32> to vector<16x128xbf16>
    %c20_i32 = arith.constant 20 : i32
    %33 = vector.broadcast %c20_i32 : i32 to vector<16x128xi32>
    %34 = arith.shrsi %7, %33 : vector<16x128xi32>
    %c15_i32_15 = arith.constant 15 : i32
    %35 = vector.broadcast %c15_i32_15 : i32 to vector<16x128xi32>
    %36 = arith.andi %34, %35 : vector<16x128xi32>
    %37 = arith.sitofp %36 : vector<16x128xi32> to vector<16x128xbf16>
    %c24_i32 = arith.constant 24 : i32
    %38 = vector.broadcast %c24_i32 : i32 to vector<16x128xi32>
    %39 = arith.shrsi %7, %38 : vector<16x128xi32>
    %c15_i32_16 = arith.constant 15 : i32
    %40 = vector.broadcast %c15_i32_16 : i32 to vector<16x128xi32>
    %41 = arith.andi %39, %40 : vector<16x128xi32>
    %42 = arith.sitofp %41 : vector<16x128xi32> to vector<16x128xbf16>
    %c28_i32 = arith.constant 28 : i32
    %43 = vector.broadcast %c28_i32 : i32 to vector<16x128xi32>
    %44 = arith.shrsi %7, %43 : vector<16x128xi32>
    %c15_i32_17 = arith.constant 15 : i32
    %45 = vector.broadcast %c15_i32_17 : i32 to vector<16x128xi32>
    %46 = arith.andi %44, %45 : vector<16x128xi32>
    %47 = arith.sitofp %46 : vector<16x128xi32> to vector<16x128xbf16>
    %48 = tpu.concatenate %12, %17, %22, %27, %32, %37, %42, %47 in 0 : vector<16x128xbf16>, vector<16x128xbf16>, vector<16x128xbf16>, vector<16x128xbf16>, vector<16x128xbf16>, vector<16x128xbf16>, vector<16x128xbf16>, vector<16x128xbf16> -> vector<128x128xbf16>
    %49 = vector.extract_strided_slice %3 {offsets = [0, 0], sizes = [16, 128], strides = [1, 1]} : vector<16x256xbf16> to vector<16x128xbf16>
    %cst_18 = arith.constant dense<0.000000e+00> : vector<16x128xf32>
    %50 = tpu.matmul %49, %48, %cst_18 {dimension_numbers = #tpu.dot_dimension_numbers<[1], [0], [0], [1], [0, 0, 1, 1], [], []>} : vector<16x128xbf16>, vector<128x128xbf16>, vector<16x128xf32> -> vector<16x128xf32>
    %51 = arith.extf %49 : vector<16x128xbf16> to vector<16x128xf32>
    %cst_19 = arith.constant dense<0.000000e+00> : vector<16xf32>
    %52 = vector.multi_reduction <add>, %51, %cst_19 [1] : vector<16x128xf32> to vector<16xf32>
    %53 = vector.shape_cast %52 : vector<16xf32> to vector<16x1xf32>
    %54 = vector.extract_strided_slice %4 {offsets = [0, 0, 0], sizes = [1, 1, 128], strides = [1, 1, 1]} : vector<1x2x128xf32> to vector<1x1x128xf32>
    %55 = vector.shape_cast %54 : vector<1x1x128xf32> to vector<1x128xf32>
    %56 = vector.extract_strided_slice %5 {offsets = [0, 0, 0], sizes = [1, 1, 128], strides = [1, 1, 1]} : vector<1x2x128xf32> to vector<1x1x128xf32>
    %57 = vector.shape_cast %56 : vector<1x1x128xf32> to vector<1x128xf32>
    %58 = vector.broadcast %55 : vector<1x128xf32> to vector<16x128xf32>
    %59 = arith.mulf %50, %58 : vector<16x128xf32>
    %60 = arith.addf %6, %59 : vector<16x128xf32>
    %61 = vector.broadcast %53 : vector<16x1xf32> to vector<16x128xf32>
    %62 = vector.broadcast %57 : vector<1x128xf32> to vector<16x128xf32>
    %63 = arith.mulf %61, %62 : vector<16x128xf32>
    %64 = arith.subf %60, %63 : vector<16x128xf32>
    %c16 = arith.constant 16 : index
    %c0_20 = arith.constant 0 : index
    %65 = vector.load %arg4[%c16, %c0_20] : memref<32x128xi32, #tpu.memory_space<vmem>>, vector<16x128xi32>
    %c0_i32_21 = arith.constant 0 : i32
    %66 = vector.broadcast %c0_i32_21 : i32 to vector<16x128xi32>
    %67 = arith.shrsi %65, %66 : vector<16x128xi32>
    %c15_i32_22 = arith.constant 15 : i32
    %68 = vector.broadcast %c15_i32_22 : i32 to vector<16x128xi32>
    %69 = arith.andi %67, %68 : vector<16x128xi32>
    %70 = arith.sitofp %69 : vector<16x128xi32> to vector<16x128xbf16>
    %c4_i32_23 = arith.constant 4 : i32
    %71 = vector.broadcast %c4_i32_23 : i32 to vector<16x128xi32>
    %72 = arith.shrsi %65, %71 : vector<16x128xi32>
    %c15_i32_24 = arith.constant 15 : i32
    %73 = vector.broadcast %c15_i32_24 : i32 to vector<16x128xi32>
    %74 = arith.andi %72, %73 : vector<16x128xi32>
    %75 = arith.sitofp %74 : vector<16x128xi32> to vector<16x128xbf16>
    %c8_i32_25 = arith.constant 8 : i32
    %76 = vector.broadcast %c8_i32_25 : i32 to vector<16x128xi32>
    %77 = arith.shrsi %65, %76 : vector<16x128xi32>
    %c15_i32_26 = arith.constant 15 : i32
    %78 = vector.broadcast %c15_i32_26 : i32 to vector<16x128xi32>
    %79 = arith.andi %77, %78 : vector<16x128xi32>
    %80 = arith.sitofp %79 : vector<16x128xi32> to vector<16x128xbf16>
    %c12_i32_27 = arith.constant 12 : i32
    %81 = vector.broadcast %c12_i32_27 : i32 to vector<16x128xi32>
    %82 = arith.shrsi %65, %81 : vector<16x128xi32>
    %c15_i32_28 = arith.constant 15 : i32
    %83 = vector.broadcast %c15_i32_28 : i32 to vector<16x128xi32>
    %84 = arith.andi %82, %83 : vector<16x128xi32>
    %85 = arith.sitofp %84 : vector<16x128xi32> to vector<16x128xbf16>
    %c16_i32_29 = arith.constant 16 : i32
    %86 = vector.broadcast %c16_i32_29 : i32 to vector<16x128xi32>
    %87 = arith.shrsi %65, %86 : vector<16x128xi32>
    %c15_i32_30 = arith.constant 15 : i32
    %88 = vector.broadcast %c15_i32_30 : i32 to vector<16x128xi32>
    %89 = arith.andi %87, %88 : vector<16x128xi32>
    %90 = arith.sitofp %89 : vector<16x128xi32> to vector<16x128xbf16>
    %c20_i32_31 = arith.constant 20 : i32
    %91 = vector.broadcast %c20_i32_31 : i32 to vector<16x128xi32>
    %92 = arith.shrsi %65, %91 : vector<16x128xi32>
    %c15_i32_32 = arith.constant 15 : i32
    %93 = vector.broadcast %c15_i32_32 : i32 to vector<16x128xi32>
    %94 = arith.andi %92, %93 : vector<16x128xi32>
    %95 = arith.sitofp %94 : vector<16x128xi32> to vector<16x128xbf16>
    %c24_i32_33 = arith.constant 24 : i32
    %96 = vector.broadcast %c24_i32_33 : i32 to vector<16x128xi32>
    %97 = arith.shrsi %65, %96 : vector<16x128xi32>
    %c15_i32_34 = arith.constant 15 : i32
    %98 = vector.broadcast %c15_i32_34 : i32 to vector<16x128xi32>
    %99 = arith.andi %97, %98 : vector<16x128xi32>
    %100 = arith.sitofp %99 : vector<16x128xi32> to vector<16x128xbf16>
    %c28_i32_35 = arith.constant 28 : i32
    %101 = vector.broadcast %c28_i32_35 : i32 to vector<16x128xi32>
    %102 = arith.shrsi %65, %101 : vector<16x128xi32>
    %c15_i32_36 = arith.constant 15 : i32
    %103 = vector.broadcast %c15_i32_36 : i32 to vector<16x128xi32>
    %104 = arith.andi %102, %103 : vector<16x128xi32>
    %105 = arith.sitofp %104 : vector<16x128xi32> to vector<16x128xbf16>
    %106 = tpu.concatenate %70, %75, %80, %85, %90, %95, %100, %105 in 0 : vector<16x128xbf16>, vector<16x128xbf16>, vector<16x128xbf16>, vector<16x128xbf16>, vector<16x128xbf16>, vector<16x128xbf16>, vector<16x128xbf16>, vector<16x128xbf16> -> vector<128x128xbf16>
    %107 = vector.extract_strided_slice %3 {offsets = [0, 128], sizes = [16, 128], strides = [1, 1]} : vector<16x256xbf16> to vector<16x128xbf16>
    %cst_37 = arith.constant dense<0.000000e+00> : vector<16x128xf32>
    %108 = tpu.matmul %107, %106, %cst_37 {dimension_numbers = #tpu.dot_dimension_numbers<[1], [0], [0], [1], [0, 0, 1, 1], [], []>} : vector<16x128xbf16>, vector<128x128xbf16>, vector<16x128xf32> -> vector<16x128xf32>
    %109 = arith.extf %107 : vector<16x128xbf16> to vector<16x128xf32>
    %cst_38 = arith.constant dense<0.000000e+00> : vector<16xf32>
    %110 = vector.multi_reduction <add>, %109, %cst_38 [1] : vector<16x128xf32> to vector<16xf32>
    %111 = vector.shape_cast %110 : vector<16xf32> to vector<16x1xf32>
    %112 = vector.extract_strided_slice %4 {offsets = [0, 1, 0], sizes = [1, 1, 128], strides = [1, 1, 1]} : vector<1x2x128xf32> to vector<1x1x128xf32>
    %113 = vector.shape_cast %112 : vector<1x1x128xf32> to vector<1x128xf32>
    %114 = vector.extract_strided_slice %5 {offsets = [0, 1, 0], sizes = [1, 1, 128], strides = [1, 1, 1]} : vector<1x2x128xf32> to vector<1x1x128xf32>
    %115 = vector.shape_cast %114 : vector<1x1x128xf32> to vector<1x128xf32>
    %116 = vector.broadcast %113 : vector<1x128xf32> to vector<16x128xf32>
    %117 = arith.mulf %108, %116 : vector<16x128xf32>
    %118 = arith.addf %64, %117 : vector<16x128xf32>
    %119 = vector.broadcast %111 : vector<16x1xf32> to vector<16x128xf32>
    %120 = vector.broadcast %115 : vector<1x128xf32> to vector<16x128xf32>
    %121 = arith.mulf %119, %120 : vector<16x128xf32>
    %122 = arith.subf %118, %121 : vector<16x128xf32>
    %c0_39 = arith.constant 0 : index
    %c0_40 = arith.constant 0 : index
    %123 = vector.load %arg7[%c0_39, %c0_40] : memref<16x128xf32, #tpu.memory_space<vmem>>, vector<16x128xf32>
    %124 = arith.addf %123, %122 : vector<16x128xf32>
    %c0_41 = arith.constant 0 : index
    %c0_42 = arith.constant 0 : index
    %125 = vector.load %arg7[%c0_41, %c0_42] : memref<16x128xf32, #tpu.memory_space<vmem>>, vector<16x128xf32>
    tpu.vector_store %arg7[%c0_41, %c0_42], %124 {strides = array<i32>} : memref<16x128xf32, #tpu.memory_space<vmem>>, vector<16x128xf32>,
    return
  }
  func.func @transform_0(%arg0: i32, %arg1: i32, %arg2: i32) -> (i32, i32) {
    %c0_i32 = arith.constant 0 : i32
    return %arg0, %arg2 : i32, i32
  }
  func.func @transform_1(%arg0: i32, %arg1: i32, %arg2: i32) -> (i32, i32) {
    %c0_i32 = arith.constant 0 : i32
    return %arg2, %arg1 : i32, i32
  }
  func.func @transform_2(%arg0: i32, %arg1: i32, %arg2: i32) -> (i32, i32, i32) {
    %c0_i32 = arith.constant 0 : i32
    %c0_i32_0 = arith.constant 0 : i32
    return %arg2, %c0_i32, %arg1 : i32, i32, i32
  }
  func.func @transform_3(%arg0: i32, %arg1: i32, %arg2: i32) -> (i32, i32, i32) {
    %c0_i32 = arith.constant 0 : i32
    %c0_i32_0 = arith.constant 0 : i32
    return %arg2, %c0_i32, %arg1 : i32, i32, i32
  }
  func.func @transform_4(%arg0: i32, %arg1: i32, %arg2: i32) -> (i32, i32) {
    %c0_i32 = arith.constant 0 : i32
    return %arg0, %arg1 : i32, i32
  }
}

</mosaic_0001>

<llo_original>
// kernel: tpu_custom_call.1
$region0: #{tpu_custom_call.1}
  #allocation0 [shape = 'u32[]', space=smem, size = 0x4, offset = 0x4, fixed_abs, tag = 'smem constant byte address 0x4 - core index']
  #allocation1 [shape = 'u32[144,128]{1,0:T(1,128)}', space=vmem, size = 0x12000, scoped, tag = 'internal scratch']
  %s0 = inlined_call_operand.hbm [shape: bf16[16,512], index: 0, kind: input, shape index: {}]
  %s1 = inlined_call_operand.hbm [shape: s32[64,256], index: 1, kind: input, shape index: {}]
  %s2 = inlined_call_operand.hbm [shape: f32[2,2,256], index: 2, kind: input, shape index: {}]
  %s3 = inlined_call_operand.vmem [shape: f32[2,2,256], index: 3, kind: input, shape index: {}]
  %s4 = inlined_call_operand.hbm [shape: f32[16,256], index: 4, kind: output, shape index: {}]
  %s5 = sld [smem:[#allocation0]]
  $region65: #{tpu_custom_call.1} parent=0
    _
  %s7 = ssub.s32 1, %s5
  %s8 = scalar_select 0, %s7, %s5
  $region1: #{tpu_custom_call.1} parent=0
    #allocation2 [shape = 'u8[16384]{0}', space=vmem, size = 0x4000, scoped, tag = 'input window, operand 0']
    #allocation3 [shape = 's32[2]{0}', space=sflag, size = 0x8, scoped, tag = 'scoped memory for tpu_custom_call.1']
    #allocation4 [shape = 's32[2]{0}', space=sflag, size = 0x8, scoped, tag = 'scoped memory for tpu_custom_call.1']
    #allocation5 [shape = 'u8[32768]{0}', space=vmem, size = 0x8000, scoped, tag = 'input window, operand 1']
    #allocation6 [shape = 's32[2]{0}', space=sflag, size = 0x8, scoped, tag = 'scoped memory for tpu_custom_call.1']
    #allocation7 [shape = 'u8[2048]{0}', space=vmem, size = 0x800, scoped, tag = 'input window, operand 2']
    #allocation8 [shape = 'u8[16384]{0}', space=vmem, size = 0x4000, scoped, tag = 'output window, operand 0']
    %9 = vsyncpa [#allocation3], 0
    %s10 = scalar_lea.sflag [#allocation3], 1
    %11 = vsyncpa %s10, 0
    %12 = vsyncpa [#allocation6], 0
    %s13 = scalar_lea.sflag [#allocation6], 1
    %14 = vsyncpa %s13, 0
    %15 = vsyncpa [#allocation4], 0
    %s16 = scalar_lea.sflag [#allocation4], 1
    %17 = vsyncpa %s16, 0
    loop: start=0, step=1, limit=6
    $region2: #{tpu_custom_call.1} parent=1 // loop_pre_header
      _
    $region3: #{tpu_custom_call.1} parent=1 // loop_header
      %s19 = sphi 0, %s23
      %p20 = scmp.ge.s32.totalorder %s19, 6
      %s26 = sphi 0, %s45
      %s27 = sphi 0, %s41
      %s28 = sphi 0, %s37
      %s29 = sphi 0, %s26
      %s30 = sphi 0, %s27
      %s31 = sphi 0, %s28
      %s32 = sphi 0, %s29
      %s33 = sphi 0, %s30
      %s34 = sphi 0, %s31
      %s50 = sphi 0, %s52
      %s53 = sphi 0, %s50
      %s54 = sphi 0, %s53
      %s70 = sphi 0, %s54
      %s78 = sphi 0, %s80
      %s81 = sphi 0, %s78
      %s82 = sphi 0, %s81
      %s98 = sphi 0, %s82
      %s106 = sphi 0, %s108
      %s109 = sphi 0, %s106
      %s110 = sphi 0, %s109
      %s126 = sphi 0, %s110
      %s134 = sphi 0, %s136
      %s137 = sphi 0, %s134
      %s138 = sphi 0, %s137
      %s154 = sphi 0, %s138
      %s162 = sphi 0, %s164
      %s165 = sphi 0, %s162
      %s166 = sphi 0, %s165
      %s182 = sphi 0, %s166
    $region4: #{tpu_custom_call.1} parent=1 // loop_header_branch
      %22 = sbr.rel (%p20) target = $region8
    $region5: #{tpu_custom_call.1} parent=1 // loop_body
      %s24 = ssub.s32 %s19, 1
      %s25 = ssub.s32 %s19, 2
      %s35 = sadd.s32 1, %s28
      %p36 = scmp.ge.s32.totalorder %s35, 2
      %s37 = scalar_select %p36, 0, %s35
      %s38 = sadd.s32 1, %s27
      %s39 = scalar_select %p36, %s38, %s27
      %p40 = scmp.ge.s32.totalorder %s39, 2
      %s41 = scalar_select %p40, 0, %s39
      %s42 = sadd.s32 1, %s26
      %s43 = scalar_select %p40, %s42, %s26
      %p44 = scmp.ge.s32.totalorder %s43, 1
      %s45 = scalar_select %p44, 0, %s43
      %s46 = ssub.s32 %s26, %s45
      %s47 = ssub.s32 %s28, %s37
      %s48 = sor.u32 %s46, %s47
      %p49 = scmp.eq.s32.totalorder %s48, 0
      %s51 = sadd.s32 %s50, 1
      %s52 = scalar_select %p49, %s50, %s51
      %p55 = pneg %p49
      %p56 = scmp.eq.s32.totalorder %s19, 3
      %p57 = por %p55, %p56
      %p58 = scmp.ne.s32.totalorder %s50, %s53
      %p59 = scmp.eq.s32.totalorder %s19, 0
      %p60 = por %p58, %p59
      %p61 = scmp.ne.s32.totalorder %s50, %s53
      %p62 = scmp.eq.s32.totalorder %s24, 3
      %p63 = por %p61, %p62
      %p64 = scmp.ne.s32.totalorder %s53, %s54
      %p65 = scmp.eq.s32.totalorder %s24, 0
      %p66 = por %p64, %p65
      %p67 = scmp.ne.s32.totalorder %s53, %s54
      %p68 = scmp.eq.s32.totalorder %s25, 3
      %p69 = por %p67, %p68
      %p71 = scmp.ne.s32.totalorder %s54, %s70
      %p72 = scmp.eq.s32.totalorder %s25, 0
      %p73 = por %p71, %p72
      %s74 = ssub.s32 %s28, %s37
      %s75 = ssub.s32 %s27, %s41
      %s76 = sor.u32 %s74, %s75
      %p77 = scmp.eq.s32.totalorder %s76, 0
      %s79 = sadd.s32 %s78, 1
      %s80 = scalar_select %p77, %s78, %s79
      %p83 = pneg %p77
      %p84 = scmp.eq.s32.totalorder %s19, 3
      %p85 = por %p83, %p84
      %p86 = scmp.ne.s32.totalorder %s78, %s81
      %p87 = scmp.eq.s32.totalorder %s19, 0
      %p88 = por %p86, %p87
      %p89 = scmp.ne.s32.totalorder %s78, %s81
      %p90 = scmp.eq.s32.totalorder %s24, 3
      %p91 = por %p89, %p90
      %p92 = scmp.ne.s32.totalorder %s81, %s82
      %p93 = scmp.eq.s32.totalorder %s24, 0
      %p94 = por %p92, %p93
      %p95 = scmp.ne.s32.totalorder %s81, %s82
      %p96 = scmp.eq.s32.totalorder %s25, 3
      %p97 = por %p95, %p96
      %p99 = scmp.ne.s32.totalorder %s82, %s98
      %p100 = scmp.eq.s32.totalorder %s25, 0
      %p101 = por %p99, %p100
      %s102 = ssub.s32 %s28, %s37
      %s103 = ssub.s32 %s27, %s41
      %s104 = sor.u32 %s102, %s103
      %p105 = scmp.eq.s32.totalorder %s104, 0
      %s107 = sadd.s32 %s106, 1
      %s108 = scalar_select %p105, %s106, %s107
      %p111 = pneg %p105
      %p112 = scmp.eq.s32.totalorder %s19, 3
      %p113 = por %p111, %p112
      %p114 = scmp.ne.s32.totalorder %s106, %s109
      %p115 = scmp.eq.s32.totalorder %s19, 0
      %p116 = por %p114, %p115
      %p117 = scmp.ne.s32.totalorder %s106, %s109
      %p118 = scmp.eq.s32.totalorder %s24, 3
      %p119 = por %p117, %p118
      %p120 = scmp.ne.s32.totalorder %s109, %s110
      %p121 = scmp.eq.s32.totalorder %s24, 0
      %p122 = por %p120, %p121
      %p123 = scmp.ne.s32.totalorder %s109, %s110
      %p124 = scmp.eq.s32.totalorder %s25, 3
      %p125 = por %p123, %p124
      %p127 = scmp.ne.s32.totalorder %s110, %s126
      %p128 = scmp.eq.s32.totalorder %s25, 0
      %p129 = por %p127, %p128
      %s130 = ssub.s32 %s28, %s37
      %s131 = ssub.s32 %s27, %s41
      %s132 = sor.u32 %s130, %s131
      %p133 = scmp.eq.s32.totalorder %s132, 0
      %s135 = sadd.s32 %s134, 1
      %s136 = scalar_select %p133, %s134, %s135
      %p139 = pneg %p133
      %p140 = scmp.eq.s32.totalorder %s19, 3
      %p141 = por %p139, %p140
      %p142 = scmp.ne.s32.totalorder %s134, %s137
      %p143 = scmp.eq.s32.totalorder %s19, 0
      %p144 = por %p142, %p143
      %p145 = scmp.ne.s32.totalorder %s134, %s137
      %p146 = scmp.eq.s32.totalorder %s24, 3
      %p147 = por %p145, %p146
      %p148 = scmp.ne.s32.totalorder %s137, %s138
      %p149 = scmp.eq.s32.totalorder %s24, 0
      %p150 = por %p148, %p149
      %p151 = scmp.ne.s32.totalorder %s137, %s138
      %p152 = scmp.eq.s32.totalorder %s25, 3
      %p153 = por %p151, %p152
      %p155 = scmp.ne.s32.totalorder %s138, %s154
      %p156 = scmp.eq.s32.totalorder %s25, 0
      %p157 = por %p155, %p156
      %s158 = ssub.s32 %s26, %s45
      %s159 = ssub.s32 %s27, %s41
      %s160 = sor.u32 %s158, %s159
      %p161 = scmp.eq.s32.totalorder %s160, 0
      %s163 = sadd.s32 %s162, 1
      %s164 = scalar_select %p161, %s162, %s163
      %p167 = pneg %p161
      %p168 = scmp.eq.s32.totalorder %s19, 3
      %p169 = por %p167, %p168
      %p170 = scmp.ne.s32.totalorder %s162, %s165
      %p171 = scmp.eq.s32.totalorder %s19, 0
      %p172 = por %p170, %p171
      %p173 = scmp.ne.s32.totalorder %s162, %s165
      %p174 = scmp.eq.s32.totalorder %s24, 3
      %p175 = por %p173, %p174
      %p176 = scmp.ne.s32.totalorder %s165, %s166
      %p177 = scmp.eq.s32.totalorder %s24, 0
      %p178 = por %p176, %p177
      %p179 = scmp.ne.s32.totalorder %s165, %s166
      %p180 = scmp.eq.s32.totalorder %s25, 3
      %p181 = por %p179, %p180
      %p183 = scmp.ne.s32.totalorder %s166, %s182
      %p184 = scmp.eq.s32.totalorder %s25, 0
      %p185 = por %p183, %p184
      %p186 = scmp.le.s32.totalorder 1, %s19
      %p187 = scmp.lt.s32.totalorder %s19, 5
      %p188 = pnand %p186, %p187
      %p189 = pneg %p188
      // Predicated region
      $region9: #{tpu_custom_call.1} parent=5 // pred_check
        _
      $region10: #{tpu_custom_call.1} parent=5 // pred_check_branch
        %191 = sbr.rel (%p188) target = $region12
      $region11: #{tpu_custom_call.1} parent=5 // pred_region
        %s192 = ssub.s32 %s19, 1
      $region12: #{tpu_custom_call.1} parent=5 // pred_fallthru
        _
      %p193 = scmp.lt.s32.totalorder %s19, 4
      // Predicated region
      $region13: #{tpu_custom_call.1} parent=5 // pred_check
        %p194 = pneg %p193
      $region14: #{tpu_custom_call.1} parent=5 // pred_check_branch
        %196 = sbr.rel (%p194) target = $region16
      $region15: #{tpu_custom_call.1} parent=5 // pred_region
        // Predicated region
        $region17: #{tpu_custom_call.1} parent=15 // pred_check
          %p197 = pneg %p60
        $region18: #{tpu_custom_call.1} parent=15 // pred_check_branch
          %199 = sbr.rel (%p197) target = $region20
        $region19: #{tpu_custom_call.1} parent=15 // pred_region
          %s200 = sand.u32 %s50, 1
          %s201 = scalar_lea.sflag [#allocation3], %s200
          %s202 = sand.u32 %s50, 1
          %s203 = smul.addr %s202, 16
          %s204 = scalar_lea.vmem [#allocation2], %s203
          %s205 = smul.u32 2, %s26
          %s206 = smul.u32 2, %s28
          %s208 = ssub.s32 256, 256
          %209 = vsyncadd %s201, %s208
          %s210 = smul.addr %s205, 4
          %s211 = sadd.s32 %s206, %s210
          %s212 = smul.addr %s211, 64
          %s213 = scalar_lea.hbm %s0, %s212
          %s214 = sshll.u32 %s204, 4
          %s215 = int_to_ptr.vmem [resolvable:$true] %s214
          %220 = dma.hbm_to_vmem [thread:$0]  %s213, 256, %s215, %s201, 256, 128, 8
        $region20: #{tpu_custom_call.1} parent=15 // pred_fallthru
          _
        // Predicated region
        $region21: #{tpu_custom_call.1} parent=15 // pred_check
          %p221 = pneg %p88
        $region22: #{tpu_custom_call.1} parent=15 // pred_check_branch
          %223 = sbr.rel (%p221) target = $region24
        $region23: #{tpu_custom_call.1} parent=15 // pred_region
          %s224 = sand.u32 %s19, 1
          %s225 = scalar_lea.sflag [#allocation6], %s224
          %s226 = sand.u32 %s78, 1
          %s227 = smul.addr %s226, 32
          %s228 = scalar_lea.vmem [#allocation5], %s227
          %s229 = smul.u32 4, %s28
          %s231 = ssub.s32 512, 512
          %232 = vsyncadd %s225, %s231
          %s233 = smul.addr %s229, 2
          %s234 = sadd.s32 %s27, %s233
          %s235 = smul.addr %s234, 128
          %s236 = scalar_lea.hbm %s1, %s235
          %s237 = sshll.u32 %s228, 4
          %s238 = int_to_ptr.vmem [resolvable:$true] %s237
          %243 = dma.hbm_to_vmem [thread:$0]  %s236, 512, %s238, %s225, 256, 128, 8
        $region24: #{tpu_custom_call.1} parent=15 // pred_fallthru
          _
        // Predicated region
        $region25: #{tpu_custom_call.1} parent=15 // pred_check
          %p244 = pneg %p116
        $region26: #{tpu_custom_call.1} parent=15 // pred_check_branch
          %246 = sbr.rel (%p244) target = $region28
        $region27: #{tpu_custom_call.1} parent=15 // pred_region
          %s247 = sand.u32 %s19, 1
          %s248 = scalar_lea.sflag [#allocation6], %s247
          %s249 = sand.u32 %s106, 1
          %s250 = smul.addr %s249, 2
          %s251 = scalar_lea.vmem [#allocation7], %s250
          %s253 = ssub.s32 32, 32
          %254 = vsyncadd %s248, %s253
          %s255 = smul.addr %s28, 2
          %s256 = sadd.s32 %s27, %s255
          %s257 = smul.addr %s256, 32
          %s258 = scalar_lea.hbm %s2, %s257
          %s260 = sshll.u32 %s251, 4
          %s261 = int_to_ptr.vmem [resolvable:$true] %s260
          %263 = dma.hbm_to_vmem [thread:$0]  %s258, 32, %s261, %s248
        $region28: #{tpu_custom_call.1} parent=15 // pred_fallthru
          _
        // Predicated region
        $region29: #{tpu_custom_call.1} parent=15 // pred_check
          %p264 = pneg %p144
        $region30: #{tpu_custom_call.1} parent=15 // pred_check_branch
          %266 = sbr.rel (%p264) target = $region32
        $region31: #{tpu_custom_call.1} parent=15 // pred_region
          %p267 = scmp.lt.s32.totalorder %s28, 1
          %s268 = scalar_select %p267, %s28, 1
          %p269 = scmp.lt.s32.totalorder %s27, 1
          %s270 = scalar_select %p269, %s27, 1
          %s271 = smul.addr %s268, 2
          %s272 = sadd.s32 %s270, %s271
          %s273 = smul.addr %s272, 2
          %s274 = scalar_lea.vmem %s3, %s273
        $region32: #{tpu_custom_call.1} parent=15 // pred_fallthru
          _
      $region16: #{tpu_custom_call.1} parent=5 // pred_fallthru
        _
      %p275 = scmp.le.s32.totalorder 1, %s19
      %p276 = scmp.lt.s32.totalorder %s19, 5
      %p277 = pnand %p275, %p276
      %p278 = pneg %p277
      // Predicated region
      $region33: #{tpu_custom_call.1} parent=5 // pred_check
        _
      $region34: #{tpu_custom_call.1} parent=5 // pred_check_branch
        %280 = sbr.rel (%p277) target = $region36
      $region35: #{tpu_custom_call.1} parent=5 // pred_region
        %s281 = ssub.s32 %s19, 1
        %s282 = sand.u32 %s53, 1
        %s283 = scalar_lea.sflag [#allocation3], %s282
        %s284 = sand.u32 %s53, 1
        %s285 = smul.addr %s284, 16
        %s286 = scalar_lea.vmem [#allocation2], %s285
        // Predicated region
        $region37: #{tpu_custom_call.1} parent=35 // pred_check
          %p287 = pneg %p66
        $region38: #{tpu_custom_call.1} parent=35 // pred_check_branch
          %289 = sbr.rel (%p287) target = $region40
        $region39: #{tpu_custom_call.1} parent=35 // pred_region
          %290 = dma.done %s283, 256
        $region40: #{tpu_custom_call.1} parent=35 // pred_fallthru
          _
        %s291 = sand.u32 %s24, 1
        %s292 = scalar_lea.sflag [#allocation6], %s291
        %s293 = sand.u32 %s81, 1
        %s294 = smul.addr %s293, 32
        %s295 = scalar_lea.vmem [#allocation5], %s294
        // Predicated region
        $region41: #{tpu_custom_call.1} parent=35 // pred_check
          %p296 = pneg %p94
        $region42: #{tpu_custom_call.1} parent=35 // pred_check_branch
          %298 = sbr.rel (%p296) target = $region44
        $region43: #{tpu_custom_call.1} parent=35 // pred_region
          %299 = dma.done %s292, 512
        $region44: #{tpu_custom_call.1} parent=35 // pred_fallthru
          _
        %s300 = sand.u32 %s24, 1
        %s301 = scalar_lea.sflag [#allocation6], %s300
        %s302 = sand.u32 %s109, 1
        %s303 = smul.addr %s302, 2
        %s304 = scalar_lea.vmem [#allocation7], %s303
        // Predicated region
        $region45: #{tpu_custom_call.1} parent=35 // pred_check
          %p305 = pneg %p122
        $region46: #{tpu_custom_call.1} parent=35 // pred_check_branch
          %307 = sbr.rel (%p305) target = $region48
        $region47: #{tpu_custom_call.1} parent=35 // pred_region
          %308 = dma.done %s301, 32
        $region48: #{tpu_custom_call.1} parent=35 // pred_fallthru
          _
        %s309 = sand.u32 %s53, 1
        %s310 = scalar_lea.sflag [#allocation3], %s309
        %s311 = sand.u32 %s53, 1
        %s312 = smul.addr %s311, 16
        %s313 = scalar_lea.vmem [#allocation2], %s312
        %p314 = pneg %p66
        %p315 = pneg %p63
        %s316 = sand.u32 %s24, 1
        %s317 = scalar_lea.sflag [#allocation6], %s316
        %s318 = sand.u32 %s81, 1
        %s319 = smul.addr %s318, 32
        %s320 = scalar_lea.vmem [#allocation5], %s319
        %p321 = pneg %p94
        %p322 = pneg %p91
        %s323 = sand.u32 %s24, 1
        %s324 = scalar_lea.sflag [#allocation6], %s323
        %s325 = sand.u32 %s109, 1
        %s326 = smul.addr %s325, 2
        %s327 = scalar_lea.vmem [#allocation7], %s326
        %p328 = pneg %p122
        %p329 = pneg %p119
        %p330 = scmp.lt.s32.totalorder %s31, 1
        %s331 = scalar_select %p330, %s31, 1
        %p332 = scmp.lt.s32.totalorder %s30, 1
        %s333 = scalar_select %p332, %s30, 1
        %s334 = smul.addr %s331, 2
        %s335 = sadd.s32 %s333, %s334
        %s336 = smul.addr %s335, 2
        %s337 = scalar_lea.vmem %s3, %s336
        %p338 = pneg %p150
        %p339 = pneg %p147
        %p340 = pneg %p178
        %p341 = pneg %p175
        %s342 = sand.u32 %s165, 1
        %s343 = scalar_lea.sflag [#allocation4], %s342
        %s344 = sand.u32 %s165, 1
        %s345 = smul.addr %s344, 16
        %s346 = scalar_lea.vmem [#allocation8], %s345
        %s347 = smul.u32 2, %s29
        %s348 = smul.u32 2, %s31
        %s349 = smul.u32 4, %s31
        %p350 = scmp.lt.s32.totalorder %s31, 1
        %s351 = scalar_select %p350, %s31, 1
        %p352 = scmp.lt.s32.totalorder %s30, 1
        %s353 = scalar_select %p352, %s30, 1
        %s354 = smul.addr %s351, 2
        %s355 = sadd.s32 %s353, %s354
        %s356 = smul.addr %s355, 2
        %s357 = scalar_lea.vmem %s3, %s356
        %s358 = smul.u32 2, %s29
        %p360 = scmp.eq.s32.totalorder %s31, 0
        // Predicated region
        $region49: #{tpu_custom_call.1} parent=35 // pred_check
          %p361 = pneg %p360
        $region50: #{tpu_custom_call.1} parent=35 // pred_check_branch
          %363 = sbr.rel (%p361) target = $region52
        $region51: #{tpu_custom_call.1} parent=35 // pred_region
          %364 = vst [vmem:[%s346] sm:$0xff] 0.0
          %365 = vst [vmem:[%s346 + $0x8] sm:$0xff] 0.0
        $region52: #{tpu_custom_call.1} parent=35 // pred_fallthru
          _
        %v366 = vld [vmem:[%s286] sm:$0xff]
        %v367 = vld [vmem:[%s286 + $0x8] sm:$0xff]
        %v368 = vld [vmem:[%s304] sm:$0x3]
        %v369 = vld [vmem:[%s357] sm:$0x3]
        %v370 = vld [vmem:[%s295] sm:$0xff]
        %v371 = vld [vmem:[%s295 + $0x8] sm:$0xff]
        %v372 = vand.u32 %v370, 15
        %v373 = vand.u32 %v371, 15
        %v374 = vcvt.s32.f32 %v372
        %v375 = vcvt.s32.f32 %v373
        %v376 = vpack.c.bf16 %v375, %v374
        %v377 = vshra.s32 %v370, 4
        %v378 = vshra.s32 %v371, 4
        %v379 = vand.u32 %v377, 15
        %v380 = vand.u32 %v378, 15
        %v381 = vcvt.s32.f32 %v379
        %v382 = vcvt.s32.f32 %v380
        %v383 = vpack.c.bf16 %v382, %v381
        %v384 = vshra.s32 %v370, 8
        %v385 = vshra.s32 %v371, 8
        %v386 = vand.u32 %v384, 15
        %v387 = vand.u32 %v385, 15
        %v388 = vcvt.s32.f32 %v386
        %v389 = vcvt.s32.f32 %v387
        %v390 = vpack.c.bf16 %v389, %v388
        %v391 = vshra.s32 %v370, 12
        %v392 = vshra.s32 %v371, 12
        %v393 = vand.u32 %v391, 15
        %v394 = vand.u32 %v392, 15
        %v395 = vcvt.s32.f32 %v393
        %v396 = vcvt.s32.f32 %v394
        %v397 = vpack.c.bf16 %v396, %v395
        %v398 = vshra.s32 %v370, 16
        %v399 = vshra.s32 %v371, 16
        %v400 = vand.u32 %v398, 15
        %v401 = vand.u32 %v399, 15
        %v402 = vcvt.s32.f32 %v400
        %v403 = vcvt.s32.f32 %v401
        %v404 = vpack.c.bf16 %v403, %v402
        %v405 = vshra.s32 %v370, 20
        %v406 = vshra.s32 %v371, 20
        %v407 = vand.u32 %v405, 15
        %v408 = vand.u32 %v406, 15
        %v409 = vcvt.s32.f32 %v407
        %v410 = vcvt.s32.f32 %v408
        %v411 = vpack.c.bf16 %v410, %v409
        %v412 = vshra.s32 %v370, 24
        %v413 = vshra.s32 %v371, 24
        %v414 = vand.u32 %v412, 15
        %v415 = vand.u32 %v413, 15
        %v416 = vcvt.s32.f32 %v414
        %v417 = vcvt.s32.f32 %v415
        %v418 = vpack.c.bf16 %v417, %v416
        %v419 = vshra.s32 %v370, 28
        %v420 = vshra.s32 %v371, 28
        %v421 = vand.u32 %v419, 15
        %v422 = vand.u32 %v420, 15
        %v423 = vcvt.s32.f32 %v421
        %v424 = vcvt.s32.f32 %v422
        %v425 = vpack.c.bf16 %v424, %v423
        %v428 = vunpack.c.l.b16 %v366
        %v429 = vunpack.c.l.b16 %v367
        %v430 = vpack.c.b16 %v429, %v428
        %432 = vmatprep.subr.bf16.mxu0 0
        %433 = vmatpush1.bf16.msra.mxu0 %v376
        %434 = vmatprep.subr.bf16.mxu0 0
        %435 = vmatpush1.bf16.msra.mxu0 %v383
        %436 = vmatprep.subr.bf16.mxu0 0
        %437 = vmatpush1.bf16.msra.mxu0 %v390
        %438 = vmatprep.subr.bf16.mxu0 0
        %439 = vmatpush1.bf16.msra.mxu0 %v397
        %440 = vmatprep.subr.bf16.mxu0 0
        %441 = vmatpush1.bf16.msra.mxu0 %v404
        %442 = vmatprep.subr.bf16.mxu0 0
        %443 = vmatpush1.bf16.msra.mxu0 %v411
        %444 = vmatprep.subr.bf16.mxu0 0
        %445 = vmatpush1.bf16.msra.mxu0 %v418
        %446 = vmatprep.subr.bf16.mxu0 0
        %447 = vmatpush1.bf16.msra.mxu0 %v425
        %448 = vmatprep.subr.bf16.mxu0 0
        %449 = vmatpush1.bf16.msra.mxu0 0
        %450 = vmatprep.subr.bf16.mxu0 0
        %451 = vmatpush1.bf16.msra.mxu0 0
        %452 = vmatprep.subr.bf16.mxu0 0
        %453 = vmatpush1.bf16.msra.mxu0 0
        %454 = vmatprep.subr.bf16.mxu0 0
        %455 = vmatpush1.bf16.msra.mxu0 0
        %456 = vmatprep.subr.bf16.mxu0 0
        %457 = vmatpush1.bf16.msra.mxu0 0
        %458 = vmatprep.subr.bf16.mxu0 0
        %459 = vmatpush1.bf16.msra.mxu0 0
        %460 = vmatprep.subr.bf16.mxu0 0
        %461 = vmatpush1.bf16.msra.mxu0 0
        %462 = vmatprep.subr.bf16.mxu0 0
        %463 = vmatpush1.bf16.msra.mxu0 0
        %464 = vmatprep.mubr.bf16.mxu0 0
        %465 = vmatmul.mubr.bf16.gmra.mrb[0].mxu0 %v430
        %v466 = vpop.f32.mrb[0].mxu0
        %v467 = vadd.f32 0.0, %v466
        %v468 = vpop.f32.mrb[0].mxu0
        %v469 = vpop.f32.mrb[0].mxu0
        %v470 = vadd.f32 0.0, %v469
        %v471 = vpop.f32.mrb[0].mxu0
        %472 = vdwg.mxu0
        %v473 = vunpack.c.l.bf16 %v366
        %v474 = vunpack.c.l.bf16 %v367
        %475 = vadd.xlane.f32.xlu0 %v473
        %v476 = vpop.xlane.xlu0 %475
        %477 = vadd.xlane.f32.xlu0 %v474
        %v478 = vpop.xlane.xlu0 %477
        %v479 = vlaneseq
        %v480 = vshrl.u32 %v479, 7
        %v481 = vsub.s32 0, %v480
        %v482 = vrot.slane %v368, %v481
        %v483 = vmul.f32 %v467, %v482
        %v484 = vmul.f32 %v470, %v482
        %v485 = vadd.f32 %v483, 0.0
        %v486 = vadd.f32 %v484, 0.0
        %v487 = vlaneseq
        %v488 = vshrl.u32 %v487, 7
        %v489 = vsub.s32 0, %v488
        %v490 = vrot.slane %v369, %v489
        %v491 = vmul.f32 %v476, %v490
        %v492 = vmul.f32 %v478, %v490
        %v493 = vsub.f32 %v485, %v491
        %v494 = vsub.f32 %v486, %v492
        %v495 = vld [vmem:[%s295 + $0x10] sm:$0xff]
        %v496 = vld [vmem:[%s295 + $0x18] sm:$0xff]
        %v497 = vand.u32 %v495, 15
        %v498 = vand.u32 %v496, 15
        %v499 = vcvt.s32.f32 %v497
        %v500 = vcvt.s32.f32 %v498
        %v501 = vpack.c.bf16 %v500, %v499
        %v502 = vshra.s32 %v495, 4
        %v503 = vshra.s32 %v496, 4
        %v504 = vand.u32 %v502, 15
        %v505 = vand.u32 %v503, 15
        %v506 = vcvt.s32.f32 %v504
        %v507 = vcvt.s32.f32 %v505
        %v508 = vpack.c.bf16 %v507, %v506
        %v509 = vshra.s32 %v495, 8
        %v510 = vshra.s32 %v496, 8
        %v511 = vand.u32 %v509, 15
        %v512 = vand.u32 %v510, 15
        %v513 = vcvt.s32.f32 %v511
        %v514 = vcvt.s32.f32 %v512
        %v515 = vpack.c.bf16 %v514, %v513
        %v516 = vshra.s32 %v495, 12
        %v517 = vshra.s32 %v496, 12
        %v518 = vand.u32 %v516, 15
        %v519 = vand.u32 %v517, 15
        %v520 = vcvt.s32.f32 %v518
        %v521 = vcvt.s32.f32 %v519
        %v522 = vpack.c.bf16 %v521, %v520
        %v523 = vshra.s32 %v495, 16
        %v524 = vshra.s32 %v496, 16
        %v525 = vand.u32 %v523, 15
        %v526 = vand.u32 %v524, 15
        %v527 = vcvt.s32.f32 %v525
        %v528 = vcvt.s32.f32 %v526
        %v529 = vpack.c.bf16 %v528, %v527
        %v530 = vshra.s32 %v495, 20
        %v531 = vshra.s32 %v496, 20
        %v532 = vand.u32 %v530, 15
        %v533 = vand.u32 %v531, 15
        %v534 = vcvt.s32.f32 %v532
        %v535 = vcvt.s32.f32 %v533
        %v536 = vpack.c.bf16 %v535, %v534
        %v537 = vshra.s32 %v495, 24
        %v538 = vshra.s32 %v496, 24
        %v539 = vand.u32 %v537, 15
        %v540 = vand.u32 %v538, 15
        %v541 = vcvt.s32.f32 %v539
        %v542 = vcvt.s32.f32 %v540
        %v543 = vpack.c.bf16 %v542, %v541
        %v544 = vshra.s32 %v495, 28
        %v545 = vshra.s32 %v496, 28
        %v546 = vand.u32 %v544, 15
        %v547 = vand.u32 %v545, 15
        %v548 = vcvt.s32.f32 %v546
        %v549 = vcvt.s32.f32 %v547
        %v550 = vpack.c.bf16 %v549, %v548
        %v551 = vunpack.c.h.b16 %v366
        %v552 = vunpack.c.h.b16 %v367
        %v553 = vpack.c.b16 %v552, %v551
        %555 = vmatprep.subr.bf16.mxu0 0
        %556 = vmatpush1.bf16.msra.mxu0 %v501
        %557 = vmatprep.subr.bf16.mxu0 0
        %558 = vmatpush1.bf16.msra.mxu0 %v508
        %559 = vmatprep.subr.bf16.mxu0 0
        %560 = vmatpush1.bf16.msra.mxu0 %v515
        %561 = vmatprep.subr.bf16.mxu0 0
        %562 = vmatpush1.bf16.msra.mxu0 %v522
        %563 = vmatprep.subr.bf16.mxu0 0
        %564 = vmatpush1.bf16.msra.mxu0 %v529
        %565 = vmatprep.subr.bf16.mxu0 0
        %566 = vmatpush1.bf16.msra.mxu0 %v536
        %567 = vmatprep.subr.bf16.mxu0 0
        %568 = vmatpush1.bf16.msra.mxu0 %v543
        %569 = vmatprep.subr.bf16.mxu0 0
        %570 = vmatpush1.bf16.msra.mxu0 %v550
        %571 = vmatprep.subr.bf16.mxu0 0
        %572 = vmatpush1.bf16.msra.mxu0 0
        %573 = vmatprep.subr.bf16.mxu0 0
        %574 = vmatpush1.bf16.msra.mxu0 0
        %575 = vmatprep.subr.bf16.mxu0 0
        %576 = vmatpush1.bf16.msra.mxu0 0
        %577 = vmatprep.subr.bf16.mxu0 0
        %578 = vmatpush1.bf16.msra.mxu0 0
        %579 = vmatprep.subr.bf16.mxu0 0
        %580 = vmatpush1.bf16.msra.mxu0 0
        %581 = vmatprep.subr.bf16.mxu0 0
        %582 = vmatpush1.bf16.msra.mxu0 0
        %583 = vmatprep.subr.bf16.mxu0 0
        %584 = vmatpush1.bf16.msra.mxu0 0
        %585 = vmatprep.subr.bf16.mxu0 0
        %586 = vmatpush1.bf16.msra.mxu0 0
        %587 = vmatprep.mubr.bf16.mxu0 0
        %588 = vmatmul.mubr.bf16.gmra.mrb[0].mxu0 %v553
        %v589 = vpop.f32.mrb[0].mxu0
        %v590 = vadd.f32 0.0, %v589
        %v591 = vpop.f32.mrb[0].mxu0
        %v592 = vpop.f32.mrb[0].mxu0
        %v593 = vadd.f32 0.0, %v592
        %v594 = vpop.f32.mrb[0].mxu0
        %595 = vdwg.mxu0
        %v596 = vrot.slane %v366, 4
        %v597 = vrot.slane %v367, 4
        %v600 = vunpack.c.l.bf16 %v596
        %v601 = vunpack.c.l.bf16 %v597
        %602 = vadd.xlane.f32.xlu0 %v600
        %v603 = vpop.xlane.xlu0 %602
        %604 = vadd.xlane.f32.xlu0 %v601
        %v605 = vpop.xlane.xlu0 %604
        %v606 = vlaneseq
        %v607 = vshrl.u32 %v606, 7
        %v608 = vsub.s32 1, %v607
        %v609 = vrot.slane %v368, %v608
        %v610 = vmul.f32 %v590, %v609
        %v611 = vmul.f32 %v593, %v609
        %v612 = vadd.f32 %v493, %v610
        %v613 = vadd.f32 %v494, %v611
        %v614 = vlaneseq
        %v615 = vshrl.u32 %v614, 7
        %v616 = vsub.s32 1, %v615
        %v617 = vrot.slane %v369, %v616
        %v618 = vmul.f32 %v603, %v617
        %v619 = vmul.f32 %v605, %v617
        %v620 = vsub.f32 %v612, %v618
        %v621 = vsub.f32 %v613, %v619
        %v622 = vld [vmem:[%s346] sm:$0xff]
        %v623 = vld [vmem:[%s346 + $0x8] sm:$0xff]
        %v624 = vadd.f32 %v622, %v620
        %v625 = vadd.f32 %v623, %v621
        %626 = vst [vmem:[%s346] sm:$0xff] %v624
        %627 = vst [vmem:[%s346 + $0x8] sm:$0xff] %v625
        %s628 = sand.u32 %s165, 1
        %s629 = scalar_lea.sflag [#allocation4], %s628
        %s630 = sand.u32 %s165, 1
        %s631 = smul.addr %s630, 16
        %s632 = scalar_lea.vmem [#allocation8], %s631
        // Predicated region
        $region53: #{tpu_custom_call.1} parent=35 // pred_check
          %p633 = pneg %p175
        $region54: #{tpu_custom_call.1} parent=35 // pred_check_branch
          %635 = sbr.rel (%p633) target = $region56
        $region55: #{tpu_custom_call.1} parent=35 // pred_region
          %s636 = smul.u32 2, %s29
          %s638 = ssub.s32 256, 256
          %639 = vsyncadd %s629, %s638
          %s640 = smul.addr %s636, 2
          %s641 = sadd.s32 %s30, %s640
          %s642 = smul.addr %s641, 128
          %s643 = scalar_lea.hbm %s4, %s642
          %s644 = sshll.u32 %s632, 4
          %s645 = int_to_ptr.vmem [resolvable:$true] %s644
          %650 = dma.vmem_to_hbm [thread:$0]  %s645, 256, %s643, %s629, 128, 256, 8
        $region56: #{tpu_custom_call.1} parent=35 // pred_fallthru
          _
      $region36: #{tpu_custom_call.1} parent=5 // pred_fallthru
        _
      %p651 = scmp.le.s32.totalorder 2, %s19
      // Predicated region
      $region57: #{tpu_custom_call.1} parent=5 // pred_check
        %p652 = pneg %p651
      $region58: #{tpu_custom_call.1} parent=5 // pred_check_branch
        %654 = sbr.rel (%p652) target = $region60
      $region59: #{tpu_custom_call.1} parent=5 // pred_region
        %s655 = ssub.s32 %s19, 2
        // Predicated region
        $region61: #{tpu_custom_call.1} parent=59 // pred_check
          %p656 = pneg %p181
        $region62: #{tpu_custom_call.1} parent=59 // pred_check_branch
          %658 = sbr.rel (%p656) target = $region64
        $region63: #{tpu_custom_call.1} parent=59 // pred_region
          %s659 = sand.u32 %s166, 1
          %s660 = scalar_lea.sflag [#allocation4], %s659
          %s661 = sand.u32 %s166, 1
          %s662 = smul.addr %s661, 16
          %s663 = scalar_lea.vmem [#allocation8], %s662
          %664 = dma.done %s660, 256
        $region64: #{tpu_custom_call.1} parent=59 // pred_fallthru
          _
      $region60: #{tpu_custom_call.1} parent=5 // pred_fallthru
        _
    $region6: #{tpu_custom_call.1} parent=1 // loop_footer
      %s23 = sadd.s32 1, %s19
    $region7: #{tpu_custom_call.1} parent=1 // loop_footer_branch
      %18 = sbr.rel target = $region3
    $region8: #{tpu_custom_call.1} parent=1 // loop_exit
      _
    %665 = vsyncpa [#allocation3], 1
    %s666 = scalar_lea.sflag [#allocation3], 1
    %667 = vsyncpa %s666, 1
    %668 = vsyncpa [#allocation6], 1
    %s669 = scalar_lea.sflag [#allocation6], 1
    %670 = vsyncpa %s669, 1
    %671 = vsyncpa [#allocation4], 1
    %s672 = scalar_lea.sflag [#allocation4], 1
    %673 = vsyncpa %s672, 1

</llo_original>
